<compile_context>
chip_gen: v7x
topology: tpu7x:2x2x1
jax: 0.10.0
libtpu: 0.0.40
codegen_flags: <defaults>
</compile_context>

<pallas_src>
import functools

import jax
import jax.numpy as jnp
from jax.experimental import pallas as pl
from jax.experimental.pallas import tpu as pltpu


def _gpconv_kernel(x_ref, w_ref, o_ref):
    # x_ref: (Cin, T)   w_ref: (Cout, Cin)   o_ref: (Cout, T)
    o_ref[...] = jnp.dot(
        w_ref[...], x_ref[...], preferred_element_type=jnp.float32
    ).astype(o_ref.dtype)


def _pick_tile_hw(hw, cin, cout, itemsize, vmem_budget_bytes=12 << 20):
    """Largest lane tile (multiple of 128, or full HW) that fits the budget.

    Budget covers the double-buffered input and output blocks plus the
    resident weight and stays well under every generation's scoped-VMEM
    limit (incl. v7x's 64 MiB physical VMEM).
    """
    budget = max(vmem_budget_bytes - cout * cin * itemsize, 1 << 20)
    per_col = 2 * (cin + cout) * itemsize  # x2 for double buffering
    cap = max(128, (budget // per_col) // 128 * 128)
    return hw if hw <= cap else cap


def _block_diag_weight(weights, dtype):
    """(G, cout_g, cin_g) -> block-diagonal (G*cout_g, G*cin_g), one scatter."""
    G, cout_g, cin_g = weights.shape
    idx = jnp.arange(G)
    w4 = jnp.zeros((G, cout_g, G, cin_g), dtype=dtype)
    # Advanced indices separated by slices -> result dims (G, cout_g, cin_g),
    # which matches `weights` exactly.
    w4 = w4.at[idx, :, idx, :].set(weights.astype(dtype))
    return w4.reshape(G * cout_g, G * cin_g)


@functools.partial(jax.jit, static_argnames=("num_groups",))
def gpconv(x_nchw, weights, *, num_groups):
    """Grouped pointwise conv.

    x_nchw:  (B, Cin, H, W)
    weights: (G, Cout_g, Cin_g)   -- native PyTorch conv weight layout
             (Cout_g, Cin_g, 1, 1) per group, with the 1x1 dims squeezed.
    returns  (B, Cout, H, W) with Cout = G * Cout_g
    """
    B, Cin, H, W = x_nchw.shape
    G = num_groups
    assert Cin % G == 0, "in_planes must be divisible by num_groups"
    cin_g = Cin // G
    assert (
        weights.ndim == 3 and weights.shape[0] == G and weights.shape[2] == cin_g
    ), "weights must have shape (num_groups, out_planes//G, in_planes//G)"
    cout_g = weights.shape[1]
    Cout = G * cout_g
    HW = H * W

    # Block-diagonal (Cout, Cin) weight: one lane-dense matmul covers all groups.
    w_bd = _block_diag_weight(weights, x_nchw.dtype)

    x_flat = x_nchw.reshape(B, Cin, HW)  # free: no transpose, no extra HBM pass

    itemsize = jnp.dtype(x_nchw.dtype).itemsize
    tile = _pick_tile_hw(HW, Cin, Cout, itemsize)
    # Give the pipeline (and v7x's two TensorCores) at least 2 grid steps when
    # B alone can't.
    if B * pl.cdiv(HW, tile) < 2 and HW >= 256:
        tile = ((HW + 1) // 2 + 127) // 128 * 128
    n_tiles = pl.cdiv(HW, tile)

    out = pl.pallas_call(
        _gpconv_kernel,
        out_shape=jax.ShapeDtypeStruct((B, Cout, HW), x_nchw.dtype),
        grid_spec=pltpu.PrefetchScalarGridSpec(
            num_scalar_prefetch=0,
            grid=(n_tiles, B),  # large spatial-tile axis first (megacore-friendly)
            in_specs=[
                # One (Cin, tile) slab per step; batch dim squeezed away.
                pl.BlockSpec((pl.Squeezed(), Cin, tile), lambda t, b: (b, 0, t)),
                # Whole (tiny) block-diagonal weight resident in VMEM; constant
                # index_map so it is never re-DMA'd across grid steps.
                pl.BlockSpec((Cout, Cin), lambda t, b: (0, 0)),
            ],
            out_specs=pl.BlockSpec(
                (pl.Squeezed(), Cout, tile), lambda t, b: (b, 0, t)
            ),
        ),
        compiler_params=pltpu.CompilerParams(
            dimension_semantics=("parallel", "parallel"),
            vmem_limit_bytes=32 * 1024 * 1024,
        ),
    )(x_flat, w_bd)

    return out.reshape(B, Cout, H, W)


def gpconv_reference(x_nchw, weights, num_groups):
    """Pure-JAX reference matching the PyTorch module (chunk + 1x1 conv + cat)."""
    B, Cin, H, W = x_nchw.shape
    G = num_groups
    cin_g = Cin // G
    outs = []
    for g in range(G):
        xg = x_nchw[:, g * cin_g:(g + 1) * cin_g]  # (B, cin_g, H, W)
        wg = weights[g]                            # (cout_g, cin_g)
        outs.append(jnp.einsum("bchw,dc->bdhw", xg, wg))
    return jnp.concatenate(outs, axis=1)


if __name__ == "__main__":
    key = jax.random.PRNGKey(0)
    k_x, k_w = jax.random.split(key)

    # Module config: in_planes=8, out_planes=8, num_groups=2
    B, Cin, H, W = 2, 8, 16, 16
    Cout, G = 8, 2
    cin_g, cout_g = Cin // G, Cout // G

    x = jax.random.normal(k_x, (B, Cin, H, W), dtype=jnp.float32)

    # Deterministic Conv2d-style init per group, PyTorch layout (cout_g, cin_g, 1, 1)
    # stored as (G, cout_g, cin_g).
    bound = 1.0 / (cin_g ** 0.5)
    weights = jax.random.uniform(
        k_w, (G, cout_g, cin_g), minval=-bound, maxval=bound, dtype=jnp.float32
    )

    # f32 path
    out = jax.block_until_ready(gpconv(x, weights, num_groups=G))
    ref = gpconv_reference(x, weights, G)
    assert out.shape == (B, Cout, H, W), out.shape
    assert jnp.allclose(out, ref, atol=1e-5, rtol=1e-5), "f32 mismatch vs reference"

    # num_groups == 1 path (module special-cases it; same kernel handles it).
    w1 = weights.reshape(1, Cout // 1 * cout_g // cout_g * cout_g * G // G, -1) \
        if False else jax.random.uniform(
            k_w, (1, Cout, Cin), minval=-1.0 / (Cin ** 0.5),
            maxval=1.0 / (Cin ** 0.5), dtype=jnp.float32)
    out_g1 = jax.block_until_ready(gpconv(x, w1, num_groups=1))
    ref_g1 = gpconv_reference(x, w1, 1)
    assert jnp.allclose(out_g1, ref_g1, atol=1e-5, rtol=1e-5), "g=1 mismatch"

    # bf16 path (half the HBM bytes for this bandwidth-bound op; f32 accumulation).
    x_bf = x.astype(jnp.bfloat16)
    w_bf = weights.astype(jnp.bfloat16)
    out_bf = jax.block_until_ready(gpconv(x_bf, w_bf, num_groups=G))
    ref_bf = gpconv_reference(x_bf.astype(jnp.float32), w_bf.astype(jnp.float32), G)
    assert out_bf.dtype == jnp.bfloat16
    assert jnp.allclose(
        out_bf.astype(jnp.float32), ref_bf, atol=5e-2, rtol=5e-2
    ), "bf16 mismatch vs reference"

    print("KERNEL_OK")
</pallas_src>

<mosaic_0001>
module attributes {stable_mosaic.version = 11 : i64} {
  func.func @_gpconv_kernel(%arg0: i32, %arg1: i32, %arg2: memref<1x8x256xf32, #tpu.memory_space<vmem>>, %arg3: memref<8x8xf32, #tpu.memory_space<vmem>>, %arg4: memref<1x8x256xf32, #tpu.memory_space<vmem>>) attributes {dimension_semantics = [#tpu.dimension_semantics<parallel>, #tpu.dimension_semantics<parallel>], iteration_bounds = array<i64: 1, 2>, scalar_prefetch = 0 : i64, scratch_operands = 0 : i64, tpu.core_type = #tpu.core_type<tc>, window_params = [{transform_indices = @transform_0, window_bounds = array<i64: 1, 8, 256>}, {pipeline_mode = #tpu.pipeline_mode<synchronous>, transform_indices = @transform_1, window_bounds = array<i64: 8, 8>}, {transform_indices = @transform_2, window_bounds = array<i64: 1, 8, 256>}]} {
    %c0 = arith.constant 0 : index
    %c0_0 = arith.constant 0 : index
    %0 = vector.load %arg3[%c0, %c0_0] : memref<8x8xf32, #tpu.memory_space<vmem>>, vector<8x8xf32>
    %c0_1 = arith.constant 0 : index
    %c0_2 = arith.constant 0 : index
    %c0_3 = arith.constant 0 : index
    %1 = vector.load %arg2[%c0_1, %c0_2, %c0_3] : memref<1x8x256xf32, #tpu.memory_space<vmem>>, vector<1x8x256xf32>
    %2 = vector.shape_cast %1 : vector<1x8x256xf32> to vector<8x256xf32>
    %cst = arith.constant dense<0.000000e+00> : vector<8x256xf32>
    %3 = tpu.matmul %0, %2, %cst {dimension_numbers = #tpu.dot_dimension_numbers<[1], [0], [0], [1], [0, 0, 1, 1], [], []>} : vector<8x8xf32>, vector<8x256xf32>, vector<8x256xf32> -> vector<8x256xf32>
    %c0_4 = arith.constant 0 : index
    %c0_5 = arith.constant 0 : index
    %c0_6 = arith.constant 0 : index
    %4 = vector.load %arg4[%c0_4, %c0_5, %c0_6] : memref<1x8x256xf32, #tpu.memory_space<vmem>>, vector<1x8x256xf32>
    %5 = vector.shape_cast %4 : vector<1x8x256xf32> to vector<8x256xf32>
    %6 = vector.shape_cast %3 : vector<8x256xf32> to vector<1x8x256xf32>
    tpu.vector_store %arg4[%c0_4, %c0_5, %c0_6], %6 {strides = array<i32>} : memref<1x8x256xf32, #tpu.memory_space<vmem>>, vector<1x8x256xf32>,
    return
  }
  func.func @transform_0(%arg0: i32, %arg1: i32) -> (i32, i32, i32) {
    %c0_i32 = arith.constant 0 : i32
    %c0_i32_0 = arith.constant 0 : i32
    return %arg1, %c0_i32, %arg0 : i32, i32, i32
  }
  func.func @transform_1(%arg0: i32, %arg1: i32) -> (i32, i32) {
    %c0_i32 = arith.constant 0 : i32
    %c0_i32_0 = arith.constant 0 : i32
    %c0_i32_1 = arith.constant 0 : i32
    return %c0_i32, %c0_i32_0 : i32, i32
  }
  func.func @transform_2(%arg0: i32, %arg1: i32) -> (i32, i32, i32) {
    %c0_i32 = arith.constant 0 : i32
    %c0_i32_0 = arith.constant 0 : i32
    return %arg1, %c0_i32, %arg0 : i32, i32, i32
  }
}

</mosaic_0001>

<llo_original>
// kernel: gpconv.1
$region0: #{gpconv.1}
  #allocation0 [shape = 'u32[]', space=smem, size = 0x4, offset = 0x4, fixed_abs, tag = 'smem constant byte address 0x4 - core index']
  #allocation1 [shape = 'u32[144,128]{1,0:T(1,128)}', space=vmem, size = 0x12000, scoped, tag = 'internal scratch']
  %s0 = inlined_call_operand.vmem [shape: f32[2,8,256], index: 0, kind: input, shape index: {}]
  %s1 = inlined_call_operand.vmem [shape: f32[8,8], index: 1, kind: input, shape index: {}]
  %s2 = inlined_call_operand.vmem [shape: f32[2,8,256], index: 2, kind: output, shape index: {}]
  %s3 = sld [smem:[#allocation0]]
  $region41: #{gpconv.1} parent=0
    _
  %s5 = ssub.s32 1, %s3
  %s6 = scalar_select 0, %s5, %s3
  loop: start=0, step=1, limit=4
  $region2: #{gpconv.1} parent=0 // loop_pre_header
    _
  $region3: #{gpconv.1} parent=0 // loop_header
    %s8 = sphi 0, %s12
    %p9 = scmp.ge.s32.totalorder %s8, 4
    %s15 = sphi 0, %s27
    %s16 = sphi 0, %s23
    %s17 = sphi 0, %s15
    %s18 = sphi 0, %s16
    %s19 = sphi 0, %s17
    %s20 = sphi 0, %s18
    %s32 = sphi 0, %s34
    %s35 = sphi 0, %s32
    %s36 = sphi 0, %s35
    %s52 = sphi 0, %s36
    %s56 = sphi 0, %s56
    %s58 = sphi 0, %s56
    %s59 = sphi 0, %s58
    %s73 = sphi 0, %s59
    %s81 = sphi 0, %s83
    %s84 = sphi 0, %s81
    %s85 = sphi 0, %s84
    %s101 = sphi 0, %s85
  $region4: #{gpconv.1} parent=0 // loop_header_branch
    %11 = sbr.rel (%p9) target = $region8
  $region5: #{gpconv.1} parent=0 // loop_body
    %s13 = ssub.s32 %s8, 1
    %s14 = ssub.s32 %s8, 2
    %s21 = sadd.s32 1, %s16
    %p22 = scmp.ge.s32.totalorder %s21, 2
    %s23 = scalar_select %p22, 0, %s21
    %s24 = sadd.s32 1, %s15
    %s25 = scalar_select %p22, %s24, %s15
    %p26 = scmp.ge.s32.totalorder %s25, 1
    %s27 = scalar_select %p26, 0, %s25
    %s28 = ssub.s32 %s16, %s23
    %s29 = ssub.s32 %s15, %s27
    %s30 = sor.u32 %s28, %s29
    %p31 = scmp.eq.s32.totalorder %s30, 0
    %s33 = sadd.s32 %s32, 1
    %s34 = scalar_select %p31, %s32, %s33
    %p37 = pneg %p31
    %p38 = scmp.eq.s32.totalorder %s8, 1
    %p39 = por %p37, %p38
    %p40 = scmp.ne.s32.totalorder %s32, %s35
    %p41 = scmp.eq.s32.totalorder %s8, 0
    %p42 = por %p40, %p41
    %p43 = scmp.ne.s32.totalorder %s32, %s35
    %p44 = scmp.eq.s32.totalorder %s13, 1
    %p45 = por %p43, %p44
    %p46 = scmp.ne.s32.totalorder %s35, %s36
    %p47 = scmp.eq.s32.totalorder %s13, 0
    %p48 = por %p46, %p47
    %p49 = scmp.ne.s32.totalorder %s35, %s36
    %p50 = scmp.eq.s32.totalorder %s14, 1
    %p51 = por %p49, %p50
    %p53 = scmp.ne.s32.totalorder %s36, %s52
    %p54 = scmp.eq.s32.totalorder %s14, 0
    %p55 = por %p53, %p54
    %s57 = sadd.s32 %s56, 1
    %p60 = scmp.eq.s32.totalorder %s8, 1
    %p61 = scmp.ne.s32.totalorder %s56, %s58
    %p62 = scmp.eq.s32.totalorder %s8, 0
    %p63 = por %p61, %p62
    %p64 = scmp.ne.s32.totalorder %s56, %s58
    %p65 = scmp.eq.s32.totalorder %s13, 1
    %p66 = por %p64, %p65
    %p67 = scmp.ne.s32.totalorder %s58, %s59
    %p68 = scmp.eq.s32.totalorder %s13, 0
    %p69 = por %p67, %p68
    %p70 = scmp.ne.s32.totalorder %s58, %s59
    %p71 = scmp.eq.s32.totalorder %s14, 1
    %p72 = por %p70, %p71
    %p74 = scmp.ne.s32.totalorder %s59, %s73
    %p75 = scmp.eq.s32.totalorder %s14, 0
    %p76 = por %p74, %p75
    %s77 = ssub.s32 %s16, %s23
    %s78 = ssub.s32 %s15, %s27
    %s79 = sor.u32 %s77, %s78
    %p80 = scmp.eq.s32.totalorder %s79, 0
    %s82 = sadd.s32 %s81, 1
    %s83 = scalar_select %p80, %s81, %s82
    %p86 = pneg %p80
    %p87 = scmp.eq.s32.totalorder %s8, 1
    %p88 = por %p86, %p87
    %p89 = scmp.ne.s32.totalorder %s81, %s84
    %p90 = scmp.eq.s32.totalorder %s8, 0
    %p91 = por %p89, %p90
    %p92 = scmp.ne.s32.totalorder %s81, %s84
    %p93 = scmp.eq.s32.totalorder %s13, 1
    %p94 = por %p92, %p93
    %p95 = scmp.ne.s32.totalorder %s84, %s85
    %p96 = scmp.eq.s32.totalorder %s13, 0
    %p97 = por %p95, %p96
    %p98 = scmp.ne.s32.totalorder %s84, %s85
    %p99 = scmp.eq.s32.totalorder %s14, 1
    %p100 = por %p98, %p99
    %p102 = scmp.ne.s32.totalorder %s85, %s101
    %p103 = scmp.eq.s32.totalorder %s14, 0
    %p104 = por %p102, %p103
    %p105 = scmp.le.s32.totalorder 1, %s8
    %p106 = scmp.lt.s32.totalorder %s8, 3
    %p107 = pnand %p105, %p106
    %p108 = pneg %p107
    // Predicated region
    $region9: #{gpconv.1} parent=5 // pred_check
      _
    $region10: #{gpconv.1} parent=5 // pred_check_branch
      %110 = sbr.rel (%p107) target = $region12
    $region11: #{gpconv.1} parent=5 // pred_region
      %s111 = ssub.s32 %s8, 1
      // Predicated region
      $region13: #{gpconv.1} parent=11 // pred_check
        %p112 = pneg %p69
      $region14: #{gpconv.1} parent=11 // pred_check_branch
        %114 = sbr.rel (%p112) target = $region16
      $region15: #{gpconv.1} parent=11 // pred_region
        _
      $region16: #{gpconv.1} parent=11 // pred_fallthru
        _
    $region12: #{gpconv.1} parent=5 // pred_fallthru
      _
    %p115 = scmp.lt.s32.totalorder %s8, 2
    // Predicated region
    $region17: #{gpconv.1} parent=5 // pred_check
      %p116 = pneg %p115
    $region18: #{gpconv.1} parent=5 // pred_check_branch
      %118 = sbr.rel (%p116) target = $region20
    $region19: #{gpconv.1} parent=5 // pred_region
      // Predicated region
      $region21: #{gpconv.1} parent=19 // pred_check
        %p119 = pneg %p42
      $region22: #{gpconv.1} parent=19 // pred_check_branch
        %121 = sbr.rel (%p119) target = $region24
      $region23: #{gpconv.1} parent=19 // pred_region
        %s122 = smul.u32 2, %s15
        %p123 = scmp.lt.s32.totalorder %s16, 1
        %s124 = scalar_select %p123, %s16, 1
        %p125 = scmp.lt.s32.totalorder %s122, 1
        %s126 = scalar_select %p125, %s122, 1
        %s127 = smul.addr %s124, 2
        %s128 = sadd.s32 %s126, %s127
        %s129 = smul.addr %s128, 8
        %s130 = scalar_lea.vmem %s0, %s129
        %s131 = smul.u32 2, %s15
      $region24: #{gpconv.1} parent=19 // pred_fallthru
        _
    $region20: #{gpconv.1} parent=5 // pred_fallthru
      _
    %p132 = scmp.le.s32.totalorder 1, %s8
    %p133 = scmp.lt.s32.totalorder %s8, 3
    %p134 = pnand %p132, %p133
    %p135 = pneg %p134
    // Predicated region
    $region25: #{gpconv.1} parent=5 // pred_check
      _
    $region26: #{gpconv.1} parent=5 // pred_check_branch
      %137 = sbr.rel (%p134) target = $region28
    $region27: #{gpconv.1} parent=5 // pred_region
      %s138 = ssub.s32 %s8, 1
      %s139 = smul.u32 2, %s17
      %p140 = scmp.lt.s32.totalorder %s18, 1
      %s141 = scalar_select %p140, %s18, 1
      %p142 = scmp.lt.s32.totalorder %s139, 1
      %s143 = scalar_select %p142, %s139, 1
      %s144 = smul.addr %s141, 2
      %s145 = sadd.s32 %s143, %s144
      %s146 = smul.addr %s145, 8
      %s147 = scalar_lea.vmem %s0, %s146
      %p148 = pneg %p48
      %p149 = pneg %p45
      %p150 = pneg %p69
      %p151 = pneg %p66
      %p152 = pneg %p97
      %p153 = pneg %p94
      %s154 = smul.u32 2, %s17
      %p155 = scmp.lt.s32.totalorder %s18, 1
      %s156 = scalar_select %p155, %s18, 1
      %p157 = scmp.lt.s32.totalorder %s154, 1
      %s158 = scalar_select %p157, %s154, 1
      %s159 = smul.addr %s156, 2
      %s160 = sadd.s32 %s158, %s159
      %s161 = smul.addr %s160, 8
      %s162 = scalar_lea.vmem %s2, %s161
      %s163 = smul.u32 2, %s17
      %p164 = scmp.lt.s32.totalorder %s18, 1
      %s165 = scalar_select %p164, %s18, 1
      %p166 = scmp.lt.s32.totalorder %s163, 1
      %s167 = scalar_select %p166, %s163, 1
      %s168 = smul.addr %s165, 2
      %s169 = sadd.s32 %s167, %s168
      %s170 = smul.addr %s169, 8
      %s171 = scalar_lea.vmem %s0, %s170
      %s172 = smul.u32 2, %s17
      %s173 = smul.u32 2, %s17
      %p174 = scmp.lt.s32.totalorder %s18, 1
      %s175 = scalar_select %p174, %s18, 1
      %p176 = scmp.lt.s32.totalorder %s173, 1
      %s177 = scalar_select %p176, %s173, 1
      %s178 = smul.addr %s175, 2
      %s179 = sadd.s32 %s177, %s178
      %s180 = smul.addr %s179, 8
      %s181 = scalar_lea.vmem %s2, %s180
      %s182 = smul.u32 2, %s17
      %v183 = vld [vmem:[%s1] sm:$0xff]
      %v184 = vld [vmem:[%s171] sm:$0xff]
      %v185 = vld [vmem:[%s171 + $0x8] sm:$0xff]
      %vm186 = vcmask 64512
      %v188 = vsel %vm186, %v183, 0
      %190 = vmatprep.subr.mxu0 %v185
      %191 = vmatpush1.msra.mxu0 %v184
      %192 = vmatprep.subr.mxu0 0.0
      %193 = vmatpush1.msra.mxu0 0.0
      %194 = vmatprep.subr.mxu0 0.0
      %195 = vmatpush1.msra.mxu0 0.0
      %196 = vmatprep.subr.mxu0 0.0
      %197 = vmatpush1.msra.mxu0 0.0
      %198 = vmatprep.subr.mxu0 0.0
      %199 = vmatpush1.msra.mxu0 0.0
      %200 = vmatprep.subr.mxu0 0.0
      %201 = vmatpush1.msra.mxu0 0.0
      %202 = vmatprep.subr.mxu0 0.0
      %203 = vmatpush1.msra.mxu0 0.0
      %204 = vmatprep.subr.mxu0 0.0
      %205 = vmatpush1.msra.mxu0 0.0
      %206 = vmatprep.subr.mxu0 0.0
      %207 = vmatpush1.msra.mxu0 0.0
      %208 = vmatprep.subr.mxu0 0.0
      %209 = vmatpush1.msra.mxu0 0.0
      %210 = vmatprep.subr.mxu0 0.0
      %211 = vmatpush1.msra.mxu0 0.0
      %212 = vmatprep.subr.mxu0 0.0
      %213 = vmatpush1.msra.mxu0 0.0
      %214 = vmatprep.subr.mxu0 0.0
      %215 = vmatpush1.msra.mxu0 0.0
      %216 = vmatprep.subr.mxu0 0.0
      %217 = vmatpush1.msra.mxu0 0.0
      %218 = vmatprep.subr.mxu0 0.0
      %219 = vmatpush1.msra.mxu0 0.0
      %220 = vmatprep.subr.mxu0 0.0
      %221 = vmatpush1.msra.mxu0 0.0
      %222 = vmatprep.subr.mxu0 0.0
      %223 = vmatpush1.msra.mxu0 0.0
      %224 = vmatprep.subr.mxu0 0.0
      %225 = vmatpush1.msra.mxu0 0.0
      %226 = vmatprep.subr.mxu0 0.0
      %227 = vmatpush1.msra.mxu0 0.0
      %228 = vmatprep.subr.mxu0 0.0
      %229 = vmatpush1.msra.mxu0 0.0
      %230 = vmatprep.subr.mxu0 0.0
      %231 = vmatpush1.msra.mxu0 0.0
      %232 = vmatprep.subr.mxu0 0.0
      %233 = vmatpush1.msra.mxu0 0.0
      %234 = vmatprep.subr.mxu0 0.0
      %235 = vmatpush1.msra.mxu0 0.0
      %236 = vmatprep.subr.mxu0 0.0
      %237 = vmatpush1.msra.mxu0 0.0
      %238 = vmatprep.subr.mxu0 0.0
      %239 = vmatpush1.msra.mxu0 0.0
      %240 = vmatprep.subr.mxu0 0.0
      %241 = vmatpush1.msra.mxu0 0.0
      %242 = vmatprep.subr.mxu0 0.0
      %243 = vmatpush1.msra.mxu0 0.0
      %244 = vmatprep.subr.mxu0 0.0
      %245 = vmatpush1.msra.mxu0 0.0
      %246 = vmatprep.subr.mxu0 0.0
      %247 = vmatpush1.msra.mxu0 0.0
      %248 = vmatprep.subr.mxu0 0.0
      %249 = vmatpush1.msra.mxu0 0.0
      %250 = vmatprep.subr.mxu0 0.0
      %251 = vmatpush1.msra.mxu0 0.0
      %252 = vmatprep.subr.mxu0 0.0
      %253 = vmatpush1.msra.mxu0 0.0
      %254 = vmatprep.mubr.f32.mxu0 0.0
      %255 = vmatmul.mubr.f32.gmra.mrb[0].mxu0 %v188
      %v256 = vpop.f32.mrb[0].mxu0
      %v257 = vadd.f32 0.0, %v256
      %v258 = vpop.f32.mrb[0].mxu0
      %v259 = vadd.f32 0.0, %v258
      %260 = vdwg.mxu0
      %261 = vst [vmem:[%s181] sm:$0xff] %v257
      %262 = vst [vmem:[%s181 + $0x8] sm:$0xff] %v259
      %s263 = smul.u32 2, %s17
      %p264 = scmp.lt.s32.totalorder %s18, 1
      %s265 = scalar_select %p264, %s18, 1
      %p266 = scmp.lt.s32.totalorder %s263, 1
      %s267 = scalar_select %p266, %s263, 1
      %s268 = smul.addr %s265, 2
      %s269 = sadd.s32 %s267, %s268
      %s270 = smul.addr %s269, 8
      %s271 = scalar_lea.vmem %s2, %s270
      // Predicated region
      $region29: #{gpconv.1} parent=27 // pred_check
        %p272 = pneg %p94
      $region30: #{gpconv.1} parent=27 // pred_check_branch
        %274 = sbr.rel (%p272) target = $region32
      $region31: #{gpconv.1} parent=27 // pred_region
        %s275 = smul.u32 2, %s17
      $region32: #{gpconv.1} parent=27 // pred_fallthru
        _
    $region28: #{gpconv.1} parent=5 // pred_fallthru
      _
    %p276 = scmp.le.s32.totalorder 2, %s8
    // Predicated region
    $region33: #{gpconv.1} parent=5 // pred_check
      %p277 = pneg %p276
    $region34: #{gpconv.1} parent=5 // pred_check_branch
      %279 = sbr.rel (%p277) target = $region36
    $region35: #{gpconv.1} parent=5 // pred_region
      %s280 = ssub.s32 %s8, 2
      // Predicated region
      $region37: #{gpconv.1} parent=35 // pred_check
        %p281 = pneg %p100
      $region38: #{gpconv.1} parent=35 // pred_check_branch
        %283 = sbr.rel (%p281) target = $region40
      $region39: #{gpconv.1} parent=35 // pred_region
        %s284 = smul.u32 2, %s19
        %p285 = scmp.lt.s32.totalorder %s20, 1
        %s286 = scalar_select %p285, %s20, 1
        %p287 = scmp.lt.s32.totalorder %s284, 1
        %s288 = scalar_select %p287, %s284, 1
        %s289 = smul.addr %s286, 2
        %s290 = sadd.s32 %s288, %s289
        %s291 = smul.addr %s290, 8
        %s292 = scalar_lea.vmem %s2, %s291
      $region40: #{gpconv.1} parent=35 // pred_fallthru
        _
    $region36: #{gpconv.1} parent=5 // pred_fallthru
      _
  $region6: #{gpconv.1} parent=0 // loop_footer
    %s12 = sadd.s32 1, %s8
  $region7: #{gpconv.1} parent=0 // loop_footer_branch
    %7 = sbr.rel target = $region3
  $region8: #{gpconv.1} parent=0 // loop_exit
    _

</llo_original>
